<compile_context>
chip_gen: v7x
topology: tpu7x:2x2x1
jax: 0.10.0
libtpu: 0.0.40
codegen_flags: <defaults>
</compile_context>

<pallas_src>
import functools

import jax
import jax.numpy as jnp
from jax.experimental import pallas as pl
from jax.experimental.pallas import tpu as pltpu


def _round_up(x: int, m: int) -> int:
    return (x + m - 1) // m * m


def _fused_mlp_kernel(*refs, n_layers: int):
    """refs = (x_ref, w0, b0, w1, b1, ..., o_ref, act_a, act_b).

    Whole (padded) arrays are VMEM-resident. Layer loop is statically unrolled.
    """
    x_ref = refs[0]
    o_ref = refs[1 + 2 * n_layers]
    act = refs[2 + 2 * n_layers:]          # two ping-pong VMEM scratch buffers

    cur = x_ref[...]                        # f32, (B_pad, F0_pad)
    for i in range(n_layers):
        w_ref = refs[1 + 2 * i]             # (Fin_pad, Fout_pad)
        b_ref = refs[2 + 2 * i]             # (1, Fout_pad)
        y = jnp.dot(cur, w_ref[...], preferred_element_type=jnp.float32)
        y = y + b_ref[...]                  # f32 bias add (broadcast over batch)
        if i < n_layers - 1:
            y = jnp.tanh(y)                 # f32 tanh -> EUP slot, effectively free
            w_out = y.shape[1]              # static, multiple of 128
            act[i % 2][:, :w_out] = y       # write straight into next layer's input
            cur = act[i % 2][:, :w_out]
        else:
            o_ref[...] = y.astype(o_ref.dtype)


def mlp_forward(params, x):
    """Fused forward. params: list of (w_t [in,out], b [out]); x: [B, in]."""
    n_layers = len(params)
    B, f_in = x.shape
    sizes = [f_in] + [w.shape[1] for (w, _) in params]
    pad_sizes = [_round_up(s, 128) for s in sizes]      # lane-dense feature dims
    B_pad = _round_up(B, 8)                             # f32 sublane granularity

    # Zero-pad input and parameters (inert padding, sliced off at the end).
    x_pad = jnp.pad(x, ((0, B_pad - B), (0, pad_sizes[0] - sizes[0])))
    inputs = [x_pad]
    for i, (w, b) in enumerate(params):
        w_pad = jnp.pad(
            w, ((0, pad_sizes[i] - sizes[i]), (0, pad_sizes[i + 1] - sizes[i + 1])))
        b_pad = jnp.pad(
            b.reshape(1, -1), ((0, 0), (0, pad_sizes[i + 1] - sizes[i + 1])))
        inputs += [w_pad, b_pad]

    hidden_pads = pad_sizes[1:-1]
    scratch_w = max(hidden_pads) if hidden_pads else 128

    kernel = functools.partial(_fused_mlp_kernel, n_layers=n_layers)
    out_pad = pl.pallas_call(
        kernel,
        out_shape=jax.ShapeDtypeStruct((B_pad, pad_sizes[-1]), x.dtype),
        in_specs=[pl.BlockSpec(memory_space=pltpu.VMEM)] * len(inputs),
        out_specs=pl.BlockSpec(memory_space=pltpu.VMEM),
        scratch_shapes=[
            pltpu.VMEM((B_pad, scratch_w), jnp.float32),
            pltpu.VMEM((B_pad, scratch_w), jnp.float32),
        ],
    )(*inputs)
    return out_pad[:B, :sizes[-1]]


def init_mlp_params(key, sizes, dtype=jnp.float32):
    """nn.Linear-style init; weights stored pre-transposed as [in, out]."""
    params = []
    for size_in, size_out in zip(sizes[:-1], sizes[1:]):
        key, kw, kb = jax.random.split(key, 3)
        bound = 1.0 / (size_in ** 0.5)
        w_t = jax.random.uniform(kw, (size_in, size_out), dtype, -bound, bound)
        b = jax.random.uniform(kb, (size_out,), dtype, -bound, bound)
        params.append((w_t, b))
    return params


if __name__ == "__main__":
    key = jax.random.PRNGKey(0)
    sizes = [16, 32, 32, 8]   # MLP([16, 32, 32, 8])
    batch = 8

    kx, kp = jax.random.split(key)
    x = jax.random.normal(kx, (batch, sizes[0]), dtype=jnp.float32)
    params = init_mlp_params(kp, sizes)

    fwd = jax.jit(mlp_forward)
    out = jax.block_until_ready(fwd(params, x))

    # Reference in plain JAX (same math as the PyTorch module).
    ref = x
    for i, (w_t, b) in enumerate(params):
        ref = ref @ w_t + b
        if i < len(params) - 1:
            ref = jnp.tanh(ref)

    assert out.shape == (batch, sizes[-1])
    assert jnp.allclose(out, ref, atol=1e-5, rtol=1e-5)

    print("KERNEL_OK")
</pallas_src>

<mosaic_0001>
module attributes {stable_mosaic.version = 11 : i64} {
  func.func @_fused_mlp_kernel(%arg0: memref<8x128xf32, #tpu.memory_space<vmem>>, %arg1: memref<128x128xf32, #tpu.memory_space<vmem>>, %arg2: memref<1x128xf32, #tpu.memory_space<vmem>>, %arg3: memref<128x128xf32, #tpu.memory_space<vmem>>, %arg4: memref<1x128xf32, #tpu.memory_space<vmem>>, %arg5: memref<128x128xf32, #tpu.memory_space<vmem>>, %arg6: memref<1x128xf32, #tpu.memory_space<vmem>>, %arg7: memref<8x128xf32, #tpu.memory_space<vmem>>, %arg8: memref<8x128xf32, #tpu.memory_space<vmem>>, %arg9: memref<8x128xf32, #tpu.memory_space<vmem>>) attributes {dimension_semantics = [], scalar_prefetch = 0 : i64, scratch_operands = 2 : i64, tpu.core_type = #tpu.core_type<tc>} {
    %c0 = arith.constant 0 : index
    %c0_0 = arith.constant 0 : index
    %0 = vector.load %arg0[%c0, %c0_0] : memref<8x128xf32, #tpu.memory_space<vmem>>, vector<8x128xf32>
    %c0_1 = arith.constant 0 : index
    %c0_2 = arith.constant 0 : index
    %1 = vector.load %arg1[%c0_1, %c0_2] : memref<128x128xf32, #tpu.memory_space<vmem>>, vector<128x128xf32>
    %cst = arith.constant dense<0.000000e+00> : vector<8x128xf32>
    %2 = tpu.matmul %0, %1, %cst {dimension_numbers = #tpu.dot_dimension_numbers<[1], [0], [0], [1], [0, 0, 1, 1], [], []>} : vector<8x128xf32>, vector<128x128xf32>, vector<8x128xf32> -> vector<8x128xf32>
    %c0_3 = arith.constant 0 : index
    %c0_4 = arith.constant 0 : index
    %3 = vector.load %arg2[%c0_3, %c0_4] : memref<1x128xf32, #tpu.memory_space<vmem>>, vector<1x128xf32>
    %4 = vector.broadcast %3 : vector<1x128xf32> to vector<8x128xf32>
    %5 = arith.addf %2, %4 : vector<8x128xf32>
    %6 = math.tanh %5 : vector<8x128xf32>
    %c0_5 = arith.constant 0 : index
    %c0_6 = arith.constant 0 : index
    %7 = vector.load %arg8[%c0_5, %c0_6] : memref<8x128xf32, #tpu.memory_space<vmem>>, vector<8x128xf32>
    tpu.vector_store %arg8[%c0_5, %c0_6], %6 {strides = array<i32>} : memref<8x128xf32, #tpu.memory_space<vmem>>, vector<8x128xf32>,
    %c0_7 = arith.constant 0 : index
    %c0_8 = arith.constant 0 : index
    %8 = vector.load %arg8[%c0_7, %c0_8] : memref<8x128xf32, #tpu.memory_space<vmem>>, vector<8x128xf32>
    %c0_9 = arith.constant 0 : index
    %c0_10 = arith.constant 0 : index
    %9 = vector.load %arg3[%c0_9, %c0_10] : memref<128x128xf32, #tpu.memory_space<vmem>>, vector<128x128xf32>
    %cst_11 = arith.constant dense<0.000000e+00> : vector<8x128xf32>
    %10 = tpu.matmul %8, %9, %cst_11 {dimension_numbers = #tpu.dot_dimension_numbers<[1], [0], [0], [1], [0, 0, 1, 1], [], []>} : vector<8x128xf32>, vector<128x128xf32>, vector<8x128xf32> -> vector<8x128xf32>
    %c0_12 = arith.constant 0 : index
    %c0_13 = arith.constant 0 : index
    %11 = vector.load %arg4[%c0_12, %c0_13] : memref<1x128xf32, #tpu.memory_space<vmem>>, vector<1x128xf32>
    %12 = vector.broadcast %11 : vector<1x128xf32> to vector<8x128xf32>
    %13 = arith.addf %10, %12 : vector<8x128xf32>
    %14 = math.tanh %13 : vector<8x128xf32>
    %c0_14 = arith.constant 0 : index
    %c0_15 = arith.constant 0 : index
    %15 = vector.load %arg9[%c0_14, %c0_15] : memref<8x128xf32, #tpu.memory_space<vmem>>, vector<8x128xf32>
    tpu.vector_store %arg9[%c0_14, %c0_15], %14 {strides = array<i32>} : memref<8x128xf32, #tpu.memory_space<vmem>>, vector<8x128xf32>,
    %c0_16 = arith.constant 0 : index
    %c0_17 = arith.constant 0 : index
    %16 = vector.load %arg9[%c0_16, %c0_17] : memref<8x128xf32, #tpu.memory_space<vmem>>, vector<8x128xf32>
    %c0_18 = arith.constant 0 : index
    %c0_19 = arith.constant 0 : index
    %17 = vector.load %arg5[%c0_18, %c0_19] : memref<128x128xf32, #tpu.memory_space<vmem>>, vector<128x128xf32>
    %cst_20 = arith.constant dense<0.000000e+00> : vector<8x128xf32>
    %18 = tpu.matmul %16, %17, %cst_20 {dimension_numbers = #tpu.dot_dimension_numbers<[1], [0], [0], [1], [0, 0, 1, 1], [], []>} : vector<8x128xf32>, vector<128x128xf32>, vector<8x128xf32> -> vector<8x128xf32>
    %c0_21 = arith.constant 0 : index
    %c0_22 = arith.constant 0 : index
    %19 = vector.load %arg6[%c0_21, %c0_22] : memref<1x128xf32, #tpu.memory_space<vmem>>, vector<1x128xf32>
    %20 = vector.broadcast %19 : vector<1x128xf32> to vector<8x128xf32>
    %21 = arith.addf %18, %20 : vector<8x128xf32>
    %c0_23 = arith.constant 0 : index
    %c0_24 = arith.constant 0 : index
    %22 = vector.load %arg7[%c0_23, %c0_24] : memref<8x128xf32, #tpu.memory_space<vmem>>, vector<8x128xf32>
    tpu.vector_store %arg7[%c0_23, %c0_24], %21 {strides = array<i32>} : memref<8x128xf32, #tpu.memory_space<vmem>>, vector<8x128xf32>,
    return
  }
}

</mosaic_0001>

<llo_original>
// kernel: mlp_forward.1
$region0: #{mlp_forward.1}
  #allocation0 [shape = 'u32[]', space=smem, size = 0x4, offset = 0x4, fixed_abs, tag = 'smem constant byte address 0x4 - core index']
  #allocation1 [shape = 'u32[144,128]{1,0:T(1,128)}', space=vmem, size = 0x12000, scoped, tag = 'internal scratch']
  #allocation2 [shape = 'f32[8,128]{1,0:T(8,128)}', space=vmem, size = 0x1000, scoped, tag = 'scratch operand']
  #allocation3 [shape = 'f32[8,128]{1,0:T(8,128)}', space=vmem, size = 0x1000, scoped, tag = 'scratch operand']
  %s0 = inlined_call_operand.vmem [shape: f32[8,128], index: 0, kind: input, shape index: {}]
  %s1 = inlined_call_operand.vmem [shape: f32[128,128], index: 1, kind: input, shape index: {}]
  %s2 = inlined_call_operand.vmem [shape: f32[1,128], index: 2, kind: input, shape index: {}]
  %s3 = inlined_call_operand.vmem [shape: f32[128,128], index: 3, kind: input, shape index: {}]
  %s4 = inlined_call_operand.vmem [shape: f32[1,128], index: 4, kind: input, shape index: {}]
  %s5 = inlined_call_operand.vmem [shape: f32[128,128], index: 5, kind: input, shape index: {}]
  %s6 = inlined_call_operand.vmem [shape: f32[1,128], index: 6, kind: input, shape index: {}]
  %s7 = inlined_call_operand.hbm [shape: f32[8,128], index: 7, kind: output, shape index: {}]
  %s8 = sld [smem:[#allocation0]]
  $region38: #{mlp_forward.1} parent=0
    _
  %s10 = ssub.s32 1, %s8
  %s11 = scalar_select 0, %s10, %s8
  $region1: #{mlp_forward.1} parent=0
    #allocation4 [shape = 'u8[4096]{0}', space=vmem, size = 0x1000, scoped, tag = 'output window, operand 0, single buffered']
    #allocation5 [shape = 's32[1]{0}', space=sflag, size = 0x4, scoped, tag = 'scoped memory for mlp_forward.1']
    %12 = vsyncpa [#allocation5], 0
    // Predicated region
    $region2: #{mlp_forward.1} parent=1 // pred_check
      _
    $region3: #{mlp_forward.1} parent=1 // pred_check_branch
      %14 = sbr.rel (0) target = $region5
    $region4: #{mlp_forward.1} parent=1 // pred_region
      _
    $region5: #{mlp_forward.1} parent=1 // pred_fallthru
      _
    // Predicated region
    $region6: #{mlp_forward.1} parent=1 // pred_check
      _
    $region7: #{mlp_forward.1} parent=1 // pred_check_branch
      %16 = sbr.rel (0) target = $region9
    $region8: #{mlp_forward.1} parent=1 // pred_region
      _
    $region9: #{mlp_forward.1} parent=1 // pred_fallthru
      _
    // Predicated region
    $region10: #{mlp_forward.1} parent=1 // pred_check
      _
    $region11: #{mlp_forward.1} parent=1 // pred_check_branch
      %18 = sbr.rel (0) target = $region13
    $region12: #{mlp_forward.1} parent=1 // pred_region
      _
    $region13: #{mlp_forward.1} parent=1 // pred_fallthru
      _
    // Predicated region
    $region14: #{mlp_forward.1} parent=1 // pred_check
      _
    $region15: #{mlp_forward.1} parent=1 // pred_check_branch
      %20 = sbr.rel (0) target = $region17
    $region16: #{mlp_forward.1} parent=1 // pred_region
      _
    $region17: #{mlp_forward.1} parent=1 // pred_fallthru
      _
    // Predicated region
    $region18: #{mlp_forward.1} parent=1 // pred_check
      _
    $region19: #{mlp_forward.1} parent=1 // pred_check_branch
      %22 = sbr.rel (0) target = $region21
    $region20: #{mlp_forward.1} parent=1 // pred_region
      _
    $region21: #{mlp_forward.1} parent=1 // pred_fallthru
      _
    // Predicated region
    $region22: #{mlp_forward.1} parent=1 // pred_check
      _
    $region23: #{mlp_forward.1} parent=1 // pred_check_branch
      %24 = sbr.rel (0) target = $region25
    $region24: #{mlp_forward.1} parent=1 // pred_region
      _
    $region25: #{mlp_forward.1} parent=1 // pred_fallthru
      _
    // Predicated region
    $region26: #{mlp_forward.1} parent=1 // pred_check
      _
    $region27: #{mlp_forward.1} parent=1 // pred_check_branch
      %26 = sbr.rel (0) target = $region29
    $region28: #{mlp_forward.1} parent=1 // pred_region
      _
    $region29: #{mlp_forward.1} parent=1 // pred_fallthru
      _
    %v27 = vld [vmem:[%s0] sm:$0xff]
    %v28 = vld [vmem:[%s1] sm:$0xff]
    %v29 = vld [vmem:[%s1 + $0x8] sm:$0xff]
    %v30 = vld [vmem:[%s1 + $0x10] sm:$0xff]
    %v31 = vld [vmem:[%s1 + $0x18] sm:$0xff]
    %v32 = vld [vmem:[%s1 + $0x20] sm:$0xff]
    %v33 = vld [vmem:[%s1 + $0x28] sm:$0xff]
    %v34 = vld [vmem:[%s1 + $0x30] sm:$0xff]
    %v35 = vld [vmem:[%s1 + $0x38] sm:$0xff]
    %v36 = vld [vmem:[%s1 + $0x40] sm:$0xff]
    %v37 = vld [vmem:[%s1 + $0x48] sm:$0xff]
    %v38 = vld [vmem:[%s1 + $0x50] sm:$0xff]
    %v39 = vld [vmem:[%s1 + $0x58] sm:$0xff]
    %v40 = vld [vmem:[%s1 + $0x60] sm:$0xff]
    %v41 = vld [vmem:[%s1 + $0x68] sm:$0xff]
    %v42 = vld [vmem:[%s1 + $0x70] sm:$0xff]
    %v43 = vld [vmem:[%s1 + $0x78] sm:$0xff]
    %v44 = vld [vmem:[%s2] sm:$0x1]
    %v46 = vlaneseq
    %v47 = vshrl.u32 %v46, 7
    %v48 = vsub.s32 0, %v47
    %v49 = vrot.slane %v44, %v48
    %51 = vmatprep.subr.mxu0 0.0
    %52 = vmatpush1.msra.mxu0 %v28
    %53 = vmatprep.subr.mxu0 0.0
    %54 = vmatpush1.msra.mxu0 %v29
    %55 = vmatprep.subr.mxu0 0.0
    %56 = vmatpush1.msra.mxu0 %v30
    %57 = vmatprep.subr.mxu0 0.0
    %58 = vmatpush1.msra.mxu0 %v31
    %59 = vmatprep.subr.mxu0 0.0
    %60 = vmatpush1.msra.mxu0 %v32
    %61 = vmatprep.subr.mxu0 0.0
    %62 = vmatpush1.msra.mxu0 %v33
    %63 = vmatprep.subr.mxu0 0.0
    %64 = vmatpush1.msra.mxu0 %v34
    %65 = vmatprep.subr.mxu0 0.0
    %66 = vmatpush1.msra.mxu0 %v35
    %67 = vmatprep.subr.mxu0 0.0
    %68 = vmatpush1.msra.mxu0 %v36
    %69 = vmatprep.subr.mxu0 0.0
    %70 = vmatpush1.msra.mxu0 %v37
    %71 = vmatprep.subr.mxu0 0.0
    %72 = vmatpush1.msra.mxu0 %v38
    %73 = vmatprep.subr.mxu0 0.0
    %74 = vmatpush1.msra.mxu0 %v39
    %75 = vmatprep.subr.mxu0 0.0
    %76 = vmatpush1.msra.mxu0 %v40
    %77 = vmatprep.subr.mxu0 0.0
    %78 = vmatpush1.msra.mxu0 %v41
    %79 = vmatprep.subr.mxu0 0.0
    %80 = vmatpush1.msra.mxu0 %v42
    %81 = vmatprep.subr.mxu0 0.0
    %82 = vmatpush1.msra.mxu0 %v43
    %83 = vmatprep.subr.mxu0 0.0
    %84 = vmatpush1.msra.mxu0 0.0
    %85 = vmatprep.subr.mxu0 0.0
    %86 = vmatpush1.msra.mxu0 0.0
    %87 = vmatprep.subr.mxu0 0.0
    %88 = vmatpush1.msra.mxu0 0.0
    %89 = vmatprep.subr.mxu0 0.0
    %90 = vmatpush1.msra.mxu0 0.0
    %91 = vmatprep.subr.mxu0 0.0
    %92 = vmatpush1.msra.mxu0 0.0
    %93 = vmatprep.subr.mxu0 0.0
    %94 = vmatpush1.msra.mxu0 0.0
    %95 = vmatprep.subr.mxu0 0.0
    %96 = vmatpush1.msra.mxu0 0.0
    %97 = vmatprep.subr.mxu0 0.0
    %98 = vmatpush1.msra.mxu0 0.0
    %99 = vmatprep.subr.mxu0 0.0
    %100 = vmatpush1.msra.mxu0 0.0
    %101 = vmatprep.subr.mxu0 0.0
    %102 = vmatpush1.msra.mxu0 0.0
    %103 = vmatprep.subr.mxu0 0.0
    %104 = vmatpush1.msra.mxu0 0.0
    %105 = vmatprep.subr.mxu0 0.0
    %106 = vmatpush1.msra.mxu0 0.0
    %107 = vmatprep.subr.mxu0 0.0
    %108 = vmatpush1.msra.mxu0 0.0
    %109 = vmatprep.subr.mxu0 0.0
    %110 = vmatpush1.msra.mxu0 0.0
    %111 = vmatprep.subr.mxu0 0.0
    %112 = vmatpush1.msra.mxu0 0.0
    %113 = vmatprep.subr.mxu0 0.0
    %114 = vmatpush1.msra.mxu0 0.0
    %115 = vmatprep.mubr.f32.mxu0 0.0
    %116 = vmatmul.mubr.f32.gmra.mrb[0].mxu0 %v27
    %v117 = vpop.f32.mrb[0].mxu0
    %v118 = vadd.f32 %v49, %v117
    %v119 = vpop.f32.mrb[0].mxu0
    %120 = vdwg.mxu0
    %v121 = vtanh.pop %v118
    %122 = vst [vmem:[#allocation2] sm:$0xff] %v121
    %v123 = vld [vmem:[#allocation2] sm:$0xff]
    %v124 = vld [vmem:[%s3] sm:$0xff]
    %v125 = vld [vmem:[%s3 + $0x8] sm:$0xff]
    %v126 = vld [vmem:[%s3 + $0x10] sm:$0xff]
    %v127 = vld [vmem:[%s3 + $0x18] sm:$0xff]
    %v128 = vld [vmem:[%s3 + $0x20] sm:$0xff]
    %v129 = vld [vmem:[%s3 + $0x28] sm:$0xff]
    %v130 = vld [vmem:[%s3 + $0x30] sm:$0xff]
    %v131 = vld [vmem:[%s3 + $0x38] sm:$0xff]
    %v132 = vld [vmem:[%s3 + $0x40] sm:$0xff]
    %v133 = vld [vmem:[%s3 + $0x48] sm:$0xff]
    %v134 = vld [vmem:[%s3 + $0x50] sm:$0xff]
    %v135 = vld [vmem:[%s3 + $0x58] sm:$0xff]
    %v136 = vld [vmem:[%s3 + $0x60] sm:$0xff]
    %v137 = vld [vmem:[%s3 + $0x68] sm:$0xff]
    %v138 = vld [vmem:[%s3 + $0x70] sm:$0xff]
    %v139 = vld [vmem:[%s3 + $0x78] sm:$0xff]
    %v140 = vld [vmem:[%s4] sm:$0x1]
    %v142 = vlaneseq
    %v143 = vshrl.u32 %v142, 7
    %v144 = vsub.s32 0, %v143
    %v145 = vrot.slane %v140, %v144
    %147 = vmatprep.subr.mxu0 0.0
    %148 = vmatpush1.msra.mxu0 %v124
    %149 = vmatprep.subr.mxu0 0.0
    %150 = vmatpush1.msra.mxu0 %v125
    %151 = vmatprep.subr.mxu0 0.0
    %152 = vmatpush1.msra.mxu0 %v126
    %153 = vmatprep.subr.mxu0 0.0
    %154 = vmatpush1.msra.mxu0 %v127
    %155 = vmatprep.subr.mxu0 0.0
    %156 = vmatpush1.msra.mxu0 %v128
    %157 = vmatprep.subr.mxu0 0.0
    %158 = vmatpush1.msra.mxu0 %v129
    %159 = vmatprep.subr.mxu0 0.0
    %160 = vmatpush1.msra.mxu0 %v130
    %161 = vmatprep.subr.mxu0 0.0
    %162 = vmatpush1.msra.mxu0 %v131
    %163 = vmatprep.subr.mxu0 0.0
    %164 = vmatpush1.msra.mxu0 %v132
    %165 = vmatprep.subr.mxu0 0.0
    %166 = vmatpush1.msra.mxu0 %v133
    %167 = vmatprep.subr.mxu0 0.0
    %168 = vmatpush1.msra.mxu0 %v134
    %169 = vmatprep.subr.mxu0 0.0
    %170 = vmatpush1.msra.mxu0 %v135
    %171 = vmatprep.subr.mxu0 0.0
    %172 = vmatpush1.msra.mxu0 %v136
    %173 = vmatprep.subr.mxu0 0.0
    %174 = vmatpush1.msra.mxu0 %v137
    %175 = vmatprep.subr.mxu0 0.0
    %176 = vmatpush1.msra.mxu0 %v138
    %177 = vmatprep.subr.mxu0 0.0
    %178 = vmatpush1.msra.mxu0 %v139
    %179 = vmatprep.subr.mxu0 0.0
    %180 = vmatpush1.msra.mxu0 0.0
    %181 = vmatprep.subr.mxu0 0.0
    %182 = vmatpush1.msra.mxu0 0.0
    %183 = vmatprep.subr.mxu0 0.0
    %184 = vmatpush1.msra.mxu0 0.0
    %185 = vmatprep.subr.mxu0 0.0
    %186 = vmatpush1.msra.mxu0 0.0
    %187 = vmatprep.subr.mxu0 0.0
    %188 = vmatpush1.msra.mxu0 0.0
    %189 = vmatprep.subr.mxu0 0.0
    %190 = vmatpush1.msra.mxu0 0.0
    %191 = vmatprep.subr.mxu0 0.0
    %192 = vmatpush1.msra.mxu0 0.0
    %193 = vmatprep.subr.mxu0 0.0
    %194 = vmatpush1.msra.mxu0 0.0
    %195 = vmatprep.subr.mxu0 0.0
    %196 = vmatpush1.msra.mxu0 0.0
    %197 = vmatprep.subr.mxu0 0.0
    %198 = vmatpush1.msra.mxu0 0.0
    %199 = vmatprep.subr.mxu0 0.0
    %200 = vmatpush1.msra.mxu0 0.0
    %201 = vmatprep.subr.mxu0 0.0
    %202 = vmatpush1.msra.mxu0 0.0
    %203 = vmatprep.subr.mxu0 0.0
    %204 = vmatpush1.msra.mxu0 0.0
    %205 = vmatprep.subr.mxu0 0.0
    %206 = vmatpush1.msra.mxu0 0.0
    %207 = vmatprep.subr.mxu0 0.0
    %208 = vmatpush1.msra.mxu0 0.0
    %209 = vmatprep.subr.mxu0 0.0
    %210 = vmatpush1.msra.mxu0 0.0
    %211 = vmatprep.mubr.f32.mxu0 0.0
    %212 = vmatmul.mubr.f32.gmra.mrb[0].mxu0 %v123
    %v213 = vpop.f32.mrb[0].mxu0
    %v214 = vadd.f32 %v145, %v213
    %v215 = vpop.f32.mrb[0].mxu0
    %216 = vdwg.mxu0
    %v217 = vtanh.pop %v214
    %218 = vst [vmem:[#allocation3] sm:$0xff] %v217
    %v219 = vld [vmem:[#allocation3] sm:$0xff]
    %v220 = vld [vmem:[%s5] sm:$0xff]
    %v221 = vld [vmem:[%s5 + $0x8] sm:$0xff]
    %v222 = vld [vmem:[%s5 + $0x10] sm:$0xff]
    %v223 = vld [vmem:[%s5 + $0x18] sm:$0xff]
    %v224 = vld [vmem:[%s5 + $0x20] sm:$0xff]
    %v225 = vld [vmem:[%s5 + $0x28] sm:$0xff]
    %v226 = vld [vmem:[%s5 + $0x30] sm:$0xff]
    %v227 = vld [vmem:[%s5 + $0x38] sm:$0xff]
    %v228 = vld [vmem:[%s5 + $0x40] sm:$0xff]
    %v229 = vld [vmem:[%s5 + $0x48] sm:$0xff]
    %v230 = vld [vmem:[%s5 + $0x50] sm:$0xff]
    %v231 = vld [vmem:[%s5 + $0x58] sm:$0xff]
    %v232 = vld [vmem:[%s5 + $0x60] sm:$0xff]
    %v233 = vld [vmem:[%s5 + $0x68] sm:$0xff]
    %v234 = vld [vmem:[%s5 + $0x70] sm:$0xff]
    %v235 = vld [vmem:[%s5 + $0x78] sm:$0xff]
    %v236 = vld [vmem:[%s6] sm:$0x1]
    %v238 = vlaneseq
    %v239 = vshrl.u32 %v238, 7
    %v240 = vsub.s32 0, %v239
    %v241 = vrot.slane %v236, %v240
    %243 = vmatprep.subr.mxu0 0.0
    %244 = vmatpush1.msra.mxu0 %v220
    %245 = vmatprep.subr.mxu0 0.0
    %246 = vmatpush1.msra.mxu0 %v221
    %247 = vmatprep.subr.mxu0 0.0
    %248 = vmatpush1.msra.mxu0 %v222
    %249 = vmatprep.subr.mxu0 0.0
    %250 = vmatpush1.msra.mxu0 %v223
    %251 = vmatprep.subr.mxu0 0.0
    %252 = vmatpush1.msra.mxu0 %v224
    %253 = vmatprep.subr.mxu0 0.0
    %254 = vmatpush1.msra.mxu0 %v225
    %255 = vmatprep.subr.mxu0 0.0
    %256 = vmatpush1.msra.mxu0 %v226
    %257 = vmatprep.subr.mxu0 0.0
    %258 = vmatpush1.msra.mxu0 %v227
    %259 = vmatprep.subr.mxu0 0.0
    %260 = vmatpush1.msra.mxu0 %v228
    %261 = vmatprep.subr.mxu0 0.0
    %262 = vmatpush1.msra.mxu0 %v229
    %263 = vmatprep.subr.mxu0 0.0
    %264 = vmatpush1.msra.mxu0 %v230
    %265 = vmatprep.subr.mxu0 0.0
    %266 = vmatpush1.msra.mxu0 %v231
    %267 = vmatprep.subr.mxu0 0.0
    %268 = vmatpush1.msra.mxu0 %v232
    %269 = vmatprep.subr.mxu0 0.0
    %270 = vmatpush1.msra.mxu0 %v233
    %271 = vmatprep.subr.mxu0 0.0
    %272 = vmatpush1.msra.mxu0 %v234
    %273 = vmatprep.subr.mxu0 0.0
    %274 = vmatpush1.msra.mxu0 %v235
    %275 = vmatprep.subr.mxu0 0.0
    %276 = vmatpush1.msra.mxu0 0.0
    %277 = vmatprep.subr.mxu0 0.0
    %278 = vmatpush1.msra.mxu0 0.0
    %279 = vmatprep.subr.mxu0 0.0
    %280 = vmatpush1.msra.mxu0 0.0
    %281 = vmatprep.subr.mxu0 0.0
    %282 = vmatpush1.msra.mxu0 0.0
    %283 = vmatprep.subr.mxu0 0.0
    %284 = vmatpush1.msra.mxu0 0.0
    %285 = vmatprep.subr.mxu0 0.0
    %286 = vmatpush1.msra.mxu0 0.0
    %287 = vmatprep.subr.mxu0 0.0
    %288 = vmatpush1.msra.mxu0 0.0
    %289 = vmatprep.subr.mxu0 0.0
    %290 = vmatpush1.msra.mxu0 0.0
    %291 = vmatprep.subr.mxu0 0.0
    %292 = vmatpush1.msra.mxu0 0.0
    %293 = vmatprep.subr.mxu0 0.0
    %294 = vmatpush1.msra.mxu0 0.0
    %295 = vmatprep.subr.mxu0 0.0
    %296 = vmatpush1.msra.mxu0 0.0
    %297 = vmatprep.subr.mxu0 0.0
    %298 = vmatpush1.msra.mxu0 0.0
    %299 = vmatprep.subr.mxu0 0.0
    %300 = vmatpush1.msra.mxu0 0.0
    %301 = vmatprep.subr.mxu0 0.0
    %302 = vmatpush1.msra.mxu0 0.0
    %303 = vmatprep.subr.mxu0 0.0
    %304 = vmatpush1.msra.mxu0 0.0
    %305 = vmatprep.subr.mxu0 0.0
    %306 = vmatpush1.msra.mxu0 0.0
    %307 = vmatprep.mubr.f32.mxu0 0.0
    %308 = vmatmul.mubr.f32.gmra.mrb[0].mxu0 %v219
    %v309 = vpop.f32.mrb[0].mxu0
    %v310 = vadd.f32 %v241, %v309
    %v311 = vpop.f32.mrb[0].mxu0
    %312 = vdwg.mxu0
    %313 = vst [vmem:[#allocation4] sm:$0xff] %v310
    // Predicated region
    $region30: #{mlp_forward.1} parent=1 // pred_check
      _
    $region31: #{mlp_forward.1} parent=1 // pred_check_branch
      %315 = sbr.rel (0) target = $region33
    $region32: #{mlp_forward.1} parent=1 // pred_region
      %s317 = ssub.s32 128, 128
      %318 = vsyncadd [#allocation5], %s317
      %s320 = sshll.u32 [#allocation4], 4
      %s321 = int_to_ptr.vmem [resolvable:$true] %s320
      %323 = dma.vmem_to_hbm [thread:$0]  %s321, 128, %s7, [#allocation5]
    $region33: #{mlp_forward.1} parent=1 // pred_fallthru
      _
    // Predicated region
    $region34: #{mlp_forward.1} parent=1 // pred_check
      _
    $region35: #{mlp_forward.1} parent=1 // pred_check_branch
      %325 = sbr.rel (0) target = $region37
    $region36: #{mlp_forward.1} parent=1 // pred_region
      %326 = dma.done [#allocation5], 128
    $region37: #{mlp_forward.1} parent=1 // pred_fallthru
      _
    %327 = vsyncpa [#allocation5], 1

</llo_original>
